<compile_context>
chip_gen: v7x
topology: tpu7x:2x2x1
jax: 0.10.0
libtpu: 0.0.40
codegen_flags: <defaults>
</compile_context>

<pallas_src>
import functools

import jax
import jax.numpy as jnp
from jax.experimental import pallas as pl
from jax.experimental.pallas import tpu as pltpu


def _round_up(v, m):
    return ((v + m - 1) // m) * m


def _rnn_kernel(x_ref, w_in_ref, b_rnn_ref, w_hh_ref, w_fc_ref, b_fc_ref,
                act_ref, probs_ref, *, oneminusalpha, seq_len, bp):
    # Everything is VMEM-resident for the single grid step; load weights once.
    w_hh = w_hh_ref[...]                 # (Hp, Hp), pre-scaled by alpha

    hp = w_hh_ref.shape[1]

    # One batched input projection, off the serial h-dependency chain:
    # (seq_len*bp, I) @ (I, Hp) + alpha*(b_in + b_hh).
    xw_all = (jnp.dot(x_ref[...], w_in_ref[...],
                      preferred_element_type=jnp.float32)
              + b_rnn_ref[...])

    # Step 0: h starts at zero, so skip the (0 @ w_hh) matmul entirely.
    h = jnp.maximum(xw_all[0:bp, :], 0.0)
    act_ref[0] = h

    # CTRNN recurrence, fully unrolled (seq_len is small and static).
    # TODO(synk): for seq_len >> 32 switch to lax.fori_loop with xw staged in
    # VMEM scratch to avoid vreg pressure / instruction bloat.
    for t in range(1, seq_len):
        pre = jnp.dot(h, w_hh, preferred_element_type=jnp.float32)
        pre = pre + xw_all[t * bp:(t + 1) * bp, :]   # accumulate-into (v7x MRB)
        h = oneminusalpha * h + jnp.maximum(pre, 0.0)
        act_ref[t] = h                               # lane-dense unmasked store

    # fc + softmax on the final hidden state.  Padded logit lanes carry a
    # -1e30 bias so exp() underflows to 0 and the softmax matches the
    # unpadded computation.
    logits = (jnp.dot(h, w_fc_ref[...], preferred_element_type=jnp.float32)
              + b_fc_ref[...])
    m = jnp.max(logits, axis=-1, keepdims=True)
    e = jnp.exp(logits - m)
    inv = pl.reciprocal(jnp.sum(e, axis=-1, keepdims=True), approx=True)
    probs_ref[...] = e * inv


def prepare_params(params, *, alpha):
    """One-time layout prep: pad weights to lane/sublane tiles and fold alpha in.

    Run this once when parameters change; its outputs are reused across calls
    so per-forward wrapper overhead is just the x pad + output slices.
    """
    w_in, b_in, w_hh, b_hh, w_fc, b_fc = params
    input_size, hidden_size = w_in.shape
    output_size = w_fc.shape[1]
    f32 = jnp.float32

    hp = _round_up(max(hidden_size, 128), 128)   # lane-pad hidden
    op = _round_up(max(output_size, 128), 128)   # lane-pad output

    a = jnp.float32(alpha)
    w_in_p = jnp.zeros((input_size, hp), f32).at[:, :hidden_size].set(a * w_in)
    b_rnn_p = jnp.zeros((1, hp), f32).at[:, :hidden_size].set(a * (b_in + b_hh))
    w_hh_p = jnp.zeros((hp, hp), f32).at[:hidden_size, :hidden_size].set(a * w_hh)
    w_fc_p = jnp.zeros((hp, op), f32).at[:hidden_size, :output_size].set(w_fc)
    b_fc_p = jnp.full((1, op), -1e30, f32).at[:, :output_size].set(b_fc)

    padded = (w_in_p, b_rnn_p, w_hh_p, w_fc_p, b_fc_p)
    return padded, (hidden_size, output_size)


@functools.partial(jax.jit,
                   static_argnames=("hidden_size", "output_size", "oneminusalpha"))
def rnn_net_forward(x, padded_params, *, hidden_size, output_size, oneminusalpha):
    """x: (seq_len, batch, input_size) f32 -> (probs (B,O), rnn_activity (T,B,H))."""
    seq_len, batch, input_size = x.shape
    w_in_p, b_rnn_p, w_hh_p, w_fc_p, b_fc_p = padded_params
    hp = w_hh_p.shape[1]
    op = w_fc_p.shape[1]
    f32 = jnp.float32

    bp = _round_up(max(batch, 8), 8)             # sublane-pad batch

    # Per-call input prep only: pad batch and flatten time into the sublane
    # axis so the kernel can do one contiguous input-projection matmul.
    x_p = (jnp.zeros((seq_len, bp, input_size), f32)
           .at[:, :batch, :].set(x.astype(f32))
           .reshape(seq_len * bp, input_size))

    kernel = functools.partial(_rnn_kernel, oneminusalpha=oneminusalpha,
                               seq_len=seq_len, bp=bp)

    grid_spec = pltpu.PrefetchScalarGridSpec(
        num_scalar_prefetch=0,
        grid=(1,),
        in_specs=[
            pl.BlockSpec((seq_len * bp, input_size), lambda i: (0, 0)),
            pl.BlockSpec((input_size, hp), lambda i: (0, 0)),
            pl.BlockSpec((1, hp), lambda i: (0, 0)),
            pl.BlockSpec((hp, hp), lambda i: (0, 0)),
            pl.BlockSpec((hp, op), lambda i: (0, 0)),
            pl.BlockSpec((1, op), lambda i: (0, 0)),
        ],
        out_specs=[
            pl.BlockSpec((seq_len, bp, hp), lambda i: (0, 0, 0)),
            pl.BlockSpec((bp, op), lambda i: (0, 0)),
        ],
    )

    act_p, probs_p = pl.pallas_call(
        kernel,
        grid_spec=grid_spec,
        out_shape=(
            jax.ShapeDtypeStruct((seq_len, bp, hp), f32),
            jax.ShapeDtypeStruct((bp, op), f32),
        ),
        compiler_params=pltpu.CompilerParams(
            dimension_semantics=("arbitrary",)),
    )(x_p, w_in_p, b_rnn_p, w_hh_p, w_fc_p, b_fc_p)

    probs = probs_p[:batch, :output_size]
    rnn_activity = act_p[:, :batch, :hidden_size]
    return probs, rnn_activity


def rnn_net_reference(x, params, *, alpha):
    """Pure-JAX reference of the PyTorch forward."""
    w_in, b_in, w_hh, b_hh, w_fc, b_fc = params
    oneminusalpha = 1.0 - alpha
    seq_len, batch, _ = x.shape
    hidden_size = w_in.shape[1]
    h = jnp.zeros((batch, hidden_size), jnp.float32)
    acts = []
    for t in range(seq_len):
        pre = x[t] @ w_in + b_in[0] + h @ w_hh + b_hh[0]
        h = oneminusalpha * h + alpha * jnp.maximum(pre, 0.0)
        acts.append(h)
    acts = jnp.stack(acts, axis=0)
    logits = acts[-1] @ w_fc + b_fc[0]
    probs = jax.nn.softmax(logits, axis=-1)
    return probs, acts


if __name__ == "__main__":
    # Small, module-consistent shapes.
    seq_len, batch = 8, 2
    input_size, hidden_size, output_size = 4, 32, 3
    tau, dt = 100.0, 20.0
    alpha = dt / tau  # CTRNN alpha

    key = jax.random.PRNGKey(0)
    keys = jax.random.split(key, 7)

    # Deterministic parameter init (nn.Linear-style uniform bounds), stored
    # pre-transposed as (in_features, out_features).
    def linear_params(kw, kb, fan_in, fan_out):
        bound = 1.0 / jnp.sqrt(jnp.float32(fan_in))
        w = jax.random.uniform(kw, (fan_in, fan_out), jnp.float32, -bound, bound)
        b = jax.random.uniform(kb, (1, fan_out), jnp.float32, -bound, bound)
        return w, b

    w_in, b_in = linear_params(keys[0], keys[1], input_size, hidden_size)
    w_hh, b_hh = linear_params(keys[2], keys[3], hidden_size, hidden_size)
    w_fc, b_fc = linear_params(keys[4], keys[5], hidden_size, output_size)
    params = (w_in, b_in, w_hh, b_hh, w_fc, b_fc)

    x = jax.random.normal(keys[6], (seq_len, batch, input_size), jnp.float32)

    # One-time parameter prep (padding + alpha folding), off the per-call path.
    padded_params, (hs, osz) = prepare_params(params, alpha=alpha)
    padded_params = jax.block_until_ready(padded_params)

    probs, rnn_activity = rnn_net_forward(
        x, padded_params, hidden_size=hs, output_size=osz,
        oneminusalpha=1.0 - alpha)
    probs = jax.block_until_ready(probs)
    rnn_activity = jax.block_until_ready(rnn_activity)

    probs_ref, acts_ref = rnn_net_reference(x, params, alpha=alpha)
    assert probs.shape == (batch, output_size)
    assert rnn_activity.shape == (seq_len, batch, hidden_size)
    assert jnp.allclose(probs, probs_ref, atol=1e-3, rtol=1e-3)
    assert jnp.allclose(rnn_activity, acts_ref, atol=1e-3, rtol=1e-3)

    print("KERNEL_OK")
</pallas_src>

<mosaic_0001>
module attributes {stable_mosaic.version = 11 : i64} {
  func.func @_rnn_kernel(%arg0: i32, %arg1: memref<64x4xf32, #tpu.memory_space<vmem>>, %arg2: memref<4x128xf32, #tpu.memory_space<vmem>>, %arg3: memref<1x128xf32, #tpu.memory_space<vmem>>, %arg4: memref<128x128xf32, #tpu.memory_space<vmem>>, %arg5: memref<128x128xf32, #tpu.memory_space<vmem>>, %arg6: memref<1x128xf32, #tpu.memory_space<vmem>>, %arg7: memref<8x8x128xf32, #tpu.memory_space<vmem>>, %arg8: memref<8x128xf32, #tpu.memory_space<vmem>>) attributes {dimension_semantics = [#tpu.dimension_semantics<arbitrary>], iteration_bounds = array<i64: 1>, scalar_prefetch = 0 : i64, scratch_operands = 0 : i64, tpu.core_type = #tpu.core_type<tc>, window_params = [{pipeline_mode = #tpu.pipeline_mode<synchronous>, transform_indices = @transform_0, window_bounds = array<i64: 64, 4>}, {pipeline_mode = #tpu.pipeline_mode<synchronous>, transform_indices = @transform_1, window_bounds = array<i64: 4, 128>}, {pipeline_mode = #tpu.pipeline_mode<synchronous>, transform_indices = @transform_2, window_bounds = array<i64: 1, 128>}, {pipeline_mode = #tpu.pipeline_mode<synchronous>, transform_indices = @transform_3, window_bounds = array<i64: 128, 128>}, {pipeline_mode = #tpu.pipeline_mode<synchronous>, transform_indices = @transform_4, window_bounds = array<i64: 128, 128>}, {pipeline_mode = #tpu.pipeline_mode<synchronous>, transform_indices = @transform_5, window_bounds = array<i64: 1, 128>}, {pipeline_mode = #tpu.pipeline_mode<synchronous>, transform_indices = @transform_6, window_bounds = array<i64: 8, 8, 128>}, {pipeline_mode = #tpu.pipeline_mode<synchronous>, transform_indices = @transform_7, window_bounds = array<i64: 8, 128>}]} {
    %c0 = arith.constant 0 : index
    %c0_0 = arith.constant 0 : index
    %0 = vector.load %arg4[%c0, %c0_0] : memref<128x128xf32, #tpu.memory_space<vmem>>, vector<128x128xf32>
    %c0_1 = arith.constant 0 : index
    %c0_2 = arith.constant 0 : index
    %1 = vector.load %arg1[%c0_1, %c0_2] : memref<64x4xf32, #tpu.memory_space<vmem>>, vector<64x4xf32>
    %c0_3 = arith.constant 0 : index
    %c0_4 = arith.constant 0 : index
    %2 = vector.load %arg2[%c0_3, %c0_4] : memref<4x128xf32, #tpu.memory_space<vmem>>, vector<4x128xf32>
    %cst = arith.constant dense<0.000000e+00> : vector<64x128xf32>
    %3 = tpu.matmul %1, %2, %cst {dimension_numbers = #tpu.dot_dimension_numbers<[1], [0], [0], [1], [0, 0, 1, 1], [], []>} : vector<64x4xf32>, vector<4x128xf32>, vector<64x128xf32> -> vector<64x128xf32>
    %c0_5 = arith.constant 0 : index
    %c0_6 = arith.constant 0 : index
    %4 = vector.load %arg3[%c0_5, %c0_6] : memref<1x128xf32, #tpu.memory_space<vmem>>, vector<1x128xf32>
    %5 = vector.broadcast %4 : vector<1x128xf32> to vector<64x128xf32>
    %6 = arith.addf %3, %5 : vector<64x128xf32>
    %7 = vector.extract_strided_slice %6 {offsets = [0, 0], sizes = [8, 128], strides = [1, 1]} : vector<64x128xf32> to vector<8x128xf32>
    %cst_7 = arith.constant 0.000000e+00 : f32
    %8 = vector.broadcast %cst_7 : f32 to vector<8x128xf32>
    %9 = arith.maximumf %7, %8 : vector<8x128xf32>
    %c0_8 = arith.constant 0 : index
    %c0_9 = arith.constant 0 : index
    %c0_10 = arith.constant 0 : index
    %10 = vector.load %arg7[%c0_8, %c0_9, %c0_10] : memref<8x8x128xf32, #tpu.memory_space<vmem>>, vector<1x8x128xf32>
    %11 = vector.shape_cast %10 : vector<1x8x128xf32> to vector<8x128xf32>
    %12 = vector.shape_cast %9 : vector<8x128xf32> to vector<1x8x128xf32>
    tpu.vector_store %arg7[%c0_8, %c0_9, %c0_10], %12 {strides = array<i32>} : memref<8x8x128xf32, #tpu.memory_space<vmem>>, vector<1x8x128xf32>,
    %cst_11 = arith.constant dense<0.000000e+00> : vector<8x128xf32>
    %13 = tpu.matmul %9, %0, %cst_11 {dimension_numbers = #tpu.dot_dimension_numbers<[1], [0], [0], [1], [0, 0, 1, 1], [], []>} : vector<8x128xf32>, vector<128x128xf32>, vector<8x128xf32> -> vector<8x128xf32>
    %14 = vector.extract_strided_slice %6 {offsets = [8, 0], sizes = [8, 128], strides = [1, 1]} : vector<64x128xf32> to vector<8x128xf32>
    %15 = arith.addf %13, %14 : vector<8x128xf32>
    %cst_12 = arith.constant 8.000000e-01 : f32
    %16 = vector.broadcast %cst_12 : f32 to vector<8x128xf32>
    %17 = arith.mulf %16, %9 : vector<8x128xf32>
    %cst_13 = arith.constant 0.000000e+00 : f32
    %18 = vector.broadcast %cst_13 : f32 to vector<8x128xf32>
    %19 = arith.maximumf %15, %18 : vector<8x128xf32>
    %20 = arith.addf %17, %19 : vector<8x128xf32>
    %c1 = arith.constant 1 : index
    %c0_14 = arith.constant 0 : index
    %c0_15 = arith.constant 0 : index
    %21 = vector.load %arg7[%c1, %c0_14, %c0_15] : memref<8x8x128xf32, #tpu.memory_space<vmem>>, vector<1x8x128xf32>
    %22 = vector.shape_cast %21 : vector<1x8x128xf32> to vector<8x128xf32>
    %23 = vector.shape_cast %20 : vector<8x128xf32> to vector<1x8x128xf32>
    tpu.vector_store %arg7[%c1, %c0_14, %c0_15], %23 {strides = array<i32>} : memref<8x8x128xf32, #tpu.memory_space<vmem>>, vector<1x8x128xf32>,
    %cst_16 = arith.constant dense<0.000000e+00> : vector<8x128xf32>
    %24 = tpu.matmul %20, %0, %cst_16 {dimension_numbers = #tpu.dot_dimension_numbers<[1], [0], [0], [1], [0, 0, 1, 1], [], []>} : vector<8x128xf32>, vector<128x128xf32>, vector<8x128xf32> -> vector<8x128xf32>
    %25 = vector.extract_strided_slice %6 {offsets = [16, 0], sizes = [8, 128], strides = [1, 1]} : vector<64x128xf32> to vector<8x128xf32>
    %26 = arith.addf %24, %25 : vector<8x128xf32>
    %cst_17 = arith.constant 8.000000e-01 : f32
    %27 = vector.broadcast %cst_17 : f32 to vector<8x128xf32>
    %28 = arith.mulf %27, %20 : vector<8x128xf32>
    %cst_18 = arith.constant 0.000000e+00 : f32
    %29 = vector.broadcast %cst_18 : f32 to vector<8x128xf32>
    %30 = arith.maximumf %26, %29 : vector<8x128xf32>
    %31 = arith.addf %28, %30 : vector<8x128xf32>
    %c2 = arith.constant 2 : index
    %c0_19 = arith.constant 0 : index
    %c0_20 = arith.constant 0 : index
    %32 = vector.load %arg7[%c2, %c0_19, %c0_20] : memref<8x8x128xf32, #tpu.memory_space<vmem>>, vector<1x8x128xf32>
    %33 = vector.shape_cast %32 : vector<1x8x128xf32> to vector<8x128xf32>
    %34 = vector.shape_cast %31 : vector<8x128xf32> to vector<1x8x128xf32>
    tpu.vector_store %arg7[%c2, %c0_19, %c0_20], %34 {strides = array<i32>} : memref<8x8x128xf32, #tpu.memory_space<vmem>>, vector<1x8x128xf32>,
    %cst_21 = arith.constant dense<0.000000e+00> : vector<8x128xf32>
    %35 = tpu.matmul %31, %0, %cst_21 {dimension_numbers = #tpu.dot_dimension_numbers<[1], [0], [0], [1], [0, 0, 1, 1], [], []>} : vector<8x128xf32>, vector<128x128xf32>, vector<8x128xf32> -> vector<8x128xf32>
    %36 = vector.extract_strided_slice %6 {offsets = [24, 0], sizes = [8, 128], strides = [1, 1]} : vector<64x128xf32> to vector<8x128xf32>
    %37 = arith.addf %35, %36 : vector<8x128xf32>
    %cst_22 = arith.constant 8.000000e-01 : f32
    %38 = vector.broadcast %cst_22 : f32 to vector<8x128xf32>
    %39 = arith.mulf %38, %31 : vector<8x128xf32>
    %cst_23 = arith.constant 0.000000e+00 : f32
    %40 = vector.broadcast %cst_23 : f32 to vector<8x128xf32>
    %41 = arith.maximumf %37, %40 : vector<8x128xf32>
    %42 = arith.addf %39, %41 : vector<8x128xf32>
    %c3 = arith.constant 3 : index
    %c0_24 = arith.constant 0 : index
    %c0_25 = arith.constant 0 : index
    %43 = vector.load %arg7[%c3, %c0_24, %c0_25] : memref<8x8x128xf32, #tpu.memory_space<vmem>>, vector<1x8x128xf32>
    %44 = vector.shape_cast %43 : vector<1x8x128xf32> to vector<8x128xf32>
    %45 = vector.shape_cast %42 : vector<8x128xf32> to vector<1x8x128xf32>
    tpu.vector_store %arg7[%c3, %c0_24, %c0_25], %45 {strides = array<i32>} : memref<8x8x128xf32, #tpu.memory_space<vmem>>, vector<1x8x128xf32>,
    %cst_26 = arith.constant dense<0.000000e+00> : vector<8x128xf32>
    %46 = tpu.matmul %42, %0, %cst_26 {dimension_numbers = #tpu.dot_dimension_numbers<[1], [0], [0], [1], [0, 0, 1, 1], [], []>} : vector<8x128xf32>, vector<128x128xf32>, vector<8x128xf32> -> vector<8x128xf32>
    %47 = vector.extract_strided_slice %6 {offsets = [32, 0], sizes = [8, 128], strides = [1, 1]} : vector<64x128xf32> to vector<8x128xf32>
    %48 = arith.addf %46, %47 : vector<8x128xf32>
    %cst_27 = arith.constant 8.000000e-01 : f32
    %49 = vector.broadcast %cst_27 : f32 to vector<8x128xf32>
    %50 = arith.mulf %49, %42 : vector<8x128xf32>
    %cst_28 = arith.constant 0.000000e+00 : f32
    %51 = vector.broadcast %cst_28 : f32 to vector<8x128xf32>
    %52 = arith.maximumf %48, %51 : vector<8x128xf32>
    %53 = arith.addf %50, %52 : vector<8x128xf32>
    %c4 = arith.constant 4 : index
    %c0_29 = arith.constant 0 : index
    %c0_30 = arith.constant 0 : index
    %54 = vector.load %arg7[%c4, %c0_29, %c0_30] : memref<8x8x128xf32, #tpu.memory_space<vmem>>, vector<1x8x128xf32>
    %55 = vector.shape_cast %54 : vector<1x8x128xf32> to vector<8x128xf32>
    %56 = vector.shape_cast %53 : vector<8x128xf32> to vector<1x8x128xf32>
    tpu.vector_store %arg7[%c4, %c0_29, %c0_30], %56 {strides = array<i32>} : memref<8x8x128xf32, #tpu.memory_space<vmem>>, vector<1x8x128xf32>,
    %cst_31 = arith.constant dense<0.000000e+00> : vector<8x128xf32>
    %57 = tpu.matmul %53, %0, %cst_31 {dimension_numbers = #tpu.dot_dimension_numbers<[1], [0], [0], [1], [0, 0, 1, 1], [], []>} : vector<8x128xf32>, vector<128x128xf32>, vector<8x128xf32> -> vector<8x128xf32>
    %58 = vector.extract_strided_slice %6 {offsets = [40, 0], sizes = [8, 128], strides = [1, 1]} : vector<64x128xf32> to vector<8x128xf32>
    %59 = arith.addf %57, %58 : vector<8x128xf32>
    %cst_32 = arith.constant 8.000000e-01 : f32
    %60 = vector.broadcast %cst_32 : f32 to vector<8x128xf32>
    %61 = arith.mulf %60, %53 : vector<8x128xf32>
    %cst_33 = arith.constant 0.000000e+00 : f32
    %62 = vector.broadcast %cst_33 : f32 to vector<8x128xf32>
    %63 = arith.maximumf %59, %62 : vector<8x128xf32>
    %64 = arith.addf %61, %63 : vector<8x128xf32>
    %c5 = arith.constant 5 : index
    %c0_34 = arith.constant 0 : index
    %c0_35 = arith.constant 0 : index
    %65 = vector.load %arg7[%c5, %c0_34, %c0_35] : memref<8x8x128xf32, #tpu.memory_space<vmem>>, vector<1x8x128xf32>
    %66 = vector.shape_cast %65 : vector<1x8x128xf32> to vector<8x128xf32>
    %67 = vector.shape_cast %64 : vector<8x128xf32> to vector<1x8x128xf32>
    tpu.vector_store %arg7[%c5, %c0_34, %c0_35], %67 {strides = array<i32>} : memref<8x8x128xf32, #tpu.memory_space<vmem>>, vector<1x8x128xf32>,
    %cst_36 = arith.constant dense<0.000000e+00> : vector<8x128xf32>
    %68 = tpu.matmul %64, %0, %cst_36 {dimension_numbers = #tpu.dot_dimension_numbers<[1], [0], [0], [1], [0, 0, 1, 1], [], []>} : vector<8x128xf32>, vector<128x128xf32>, vector<8x128xf32> -> vector<8x128xf32>
    %69 = vector.extract_strided_slice %6 {offsets = [48, 0], sizes = [8, 128], strides = [1, 1]} : vector<64x128xf32> to vector<8x128xf32>
    %70 = arith.addf %68, %69 : vector<8x128xf32>
    %cst_37 = arith.constant 8.000000e-01 : f32
    %71 = vector.broadcast %cst_37 : f32 to vector<8x128xf32>
    %72 = arith.mulf %71, %64 : vector<8x128xf32>
    %cst_38 = arith.constant 0.000000e+00 : f32
    %73 = vector.broadcast %cst_38 : f32 to vector<8x128xf32>
    %74 = arith.maximumf %70, %73 : vector<8x128xf32>
    %75 = arith.addf %72, %74 : vector<8x128xf32>
    %c6 = arith.constant 6 : index
    %c0_39 = arith.constant 0 : index
    %c0_40 = arith.constant 0 : index
    %76 = vector.load %arg7[%c6, %c0_39, %c0_40] : memref<8x8x128xf32, #tpu.memory_space<vmem>>, vector<1x8x128xf32>
    %77 = vector.shape_cast %76 : vector<1x8x128xf32> to vector<8x128xf32>
    %78 = vector.shape_cast %75 : vector<8x128xf32> to vector<1x8x128xf32>
    tpu.vector_store %arg7[%c6, %c0_39, %c0_40], %78 {strides = array<i32>} : memref<8x8x128xf32, #tpu.memory_space<vmem>>, vector<1x8x128xf32>,
    %cst_41 = arith.constant dense<0.000000e+00> : vector<8x128xf32>
    %79 = tpu.matmul %75, %0, %cst_41 {dimension_numbers = #tpu.dot_dimension_numbers<[1], [0], [0], [1], [0, 0, 1, 1], [], []>} : vector<8x128xf32>, vector<128x128xf32>, vector<8x128xf32> -> vector<8x128xf32>
    %80 = vector.extract_strided_slice %6 {offsets = [56, 0], sizes = [8, 128], strides = [1, 1]} : vector<64x128xf32> to vector<8x128xf32>
    %81 = arith.addf %79, %80 : vector<8x128xf32>
    %cst_42 = arith.constant 8.000000e-01 : f32
    %82 = vector.broadcast %cst_42 : f32 to vector<8x128xf32>
    %83 = arith.mulf %82, %75 : vector<8x128xf32>
    %cst_43 = arith.constant 0.000000e+00 : f32
    %84 = vector.broadcast %cst_43 : f32 to vector<8x128xf32>
    %85 = arith.maximumf %81, %84 : vector<8x128xf32>
    %86 = arith.addf %83, %85 : vector<8x128xf32>
    %c7 = arith.constant 7 : index
    %c0_44 = arith.constant 0 : index
    %c0_45 = arith.constant 0 : index
    %87 = vector.load %arg7[%c7, %c0_44, %c0_45] : memref<8x8x128xf32, #tpu.memory_space<vmem>>, vector<1x8x128xf32>
    %88 = vector.shape_cast %87 : vector<1x8x128xf32> to vector<8x128xf32>
    %89 = vector.shape_cast %86 : vector<8x128xf32> to vector<1x8x128xf32>
    tpu.vector_store %arg7[%c7, %c0_44, %c0_45], %89 {strides = array<i32>} : memref<8x8x128xf32, #tpu.memory_space<vmem>>, vector<1x8x128xf32>,
    %c0_46 = arith.constant 0 : index
    %c0_47 = arith.constant 0 : index
    %90 = vector.load %arg5[%c0_46, %c0_47] : memref<128x128xf32, #tpu.memory_space<vmem>>, vector<128x128xf32>
    %cst_48 = arith.constant dense<0.000000e+00> : vector<8x128xf32>
    %91 = tpu.matmul %86, %90, %cst_48 {dimension_numbers = #tpu.dot_dimension_numbers<[1], [0], [0], [1], [0, 0, 1, 1], [], []>} : vector<8x128xf32>, vector<128x128xf32>, vector<8x128xf32> -> vector<8x128xf32>
    %c0_49 = arith.constant 0 : index
    %c0_50 = arith.constant 0 : index
    %92 = vector.load %arg6[%c0_49, %c0_50] : memref<1x128xf32, #tpu.memory_space<vmem>>, vector<1x128xf32>
    %93 = vector.broadcast %92 : vector<1x128xf32> to vector<8x128xf32>
    %94 = arith.addf %91, %93 : vector<8x128xf32>
    %cst_51 = arith.constant dense<0xFF800000> : vector<8xf32>
    %95 = vector.multi_reduction <maximumf>, %94, %cst_51 [1] : vector<8x128xf32> to vector<8xf32>
    %96 = vector.shape_cast %95 : vector<8xf32> to vector<8x1xf32>
    %97 = vector.broadcast %96 : vector<8x1xf32> to vector<8x128xf32>
    %98 = arith.subf %94, %97 : vector<8x128xf32>
    %99 = math.exp %98 : vector<8x128xf32>
    %cst_52 = arith.constant dense<0.000000e+00> : vector<8xf32>
    %100 = vector.multi_reduction <add>, %99, %cst_52 [1] : vector<8x128xf32> to vector<8xf32>
    %101 = vector.shape_cast %100 : vector<8xf32> to vector<8x1xf32>
    %102 = tpu.reciprocal %101 {approx = true} : vector<8x1xf32> -> vector<8x1xf32>
    %103 = vector.broadcast %102 : vector<8x1xf32> to vector<8x128xf32>
    %104 = arith.mulf %99, %103 : vector<8x128xf32>
    %c0_53 = arith.constant 0 : index
    %c0_54 = arith.constant 0 : index
    %105 = vector.load %arg8[%c0_53, %c0_54] : memref<8x128xf32, #tpu.memory_space<vmem>>, vector<8x128xf32>
    tpu.vector_store %arg8[%c0_53, %c0_54], %104 {strides = array<i32>} : memref<8x128xf32, #tpu.memory_space<vmem>>, vector<8x128xf32>,
    return
  }
  func.func @transform_0(%arg0: i32) -> (i32, i32) {
    %c0_i32 = arith.constant 0 : i32
    %c0_i32_0 = arith.constant 0 : i32
    %c0_i32_1 = arith.constant 0 : i32
    return %c0_i32, %c0_i32_0 : i32, i32
  }
  func.func @transform_1(%arg0: i32) -> (i32, i32) {
    %c0_i32 = arith.constant 0 : i32
    %c0_i32_0 = arith.constant 0 : i32
    %c0_i32_1 = arith.constant 0 : i32
    return %c0_i32, %c0_i32_0 : i32, i32
  }
  func.func @transform_2(%arg0: i32) -> (i32, i32) {
    %c0_i32 = arith.constant 0 : i32
    %c0_i32_0 = arith.constant 0 : i32
    %c0_i32_1 = arith.constant 0 : i32
    return %c0_i32, %c0_i32_0 : i32, i32
  }
  func.func @transform_3(%arg0: i32) -> (i32, i32) {
    %c0_i32 = arith.constant 0 : i32
    %c0_i32_0 = arith.constant 0 : i32
    %c0_i32_1 = arith.constant 0 : i32
    return %c0_i32, %c0_i32_0 : i32, i32
  }
  func.func @transform_4(%arg0: i32) -> (i32, i32) {
    %c0_i32 = arith.constant 0 : i32
    %c0_i32_0 = arith.constant 0 : i32
    %c0_i32_1 = arith.constant 0 : i32
    return %c0_i32, %c0_i32_0 : i32, i32
  }
  func.func @transform_5(%arg0: i32) -> (i32, i32) {
    %c0_i32 = arith.constant 0 : i32
    %c0_i32_0 = arith.constant 0 : i32
    %c0_i32_1 = arith.constant 0 : i32
    return %c0_i32, %c0_i32_0 : i32, i32
  }
  func.func @transform_6(%arg0: i32) -> (i32, i32, i32) {
    %c0_i32 = arith.constant 0 : i32
    %c0_i32_0 = arith.constant 0 : i32
    %c0_i32_1 = arith.constant 0 : i32
    %c0_i32_2 = arith.constant 0 : i32
    return %c0_i32, %c0_i32_0, %c0_i32_1 : i32, i32, i32
  }
  func.func @transform_7(%arg0: i32) -> (i32, i32) {
    %c0_i32 = arith.constant 0 : i32
    %c0_i32_0 = arith.constant 0 : i32
    %c0_i32_1 = arith.constant 0 : i32
    return %c0_i32, %c0_i32_0 : i32, i32
  }
}

</mosaic_0001>

<llo_original>
// kernel: rnn_net_forward.1
$region0: #{rnn_net_forward.1}
  #allocation0 [shape = 'u32[]', space=smem, size = 0x4, offset = 0x4, fixed_abs, tag = 'smem constant byte address 0x4 - core index']
  #allocation1 [shape = 'u32[144,128]{1,0:T(1,128)}', space=vmem, size = 0x12000, scoped, tag = 'internal scratch']
  %s0 = inlined_call_operand.vmem [shape: f32[64,4], index: 0, kind: input, shape index: {}]
  %s1 = inlined_call_operand.vmem [shape: f32[4,128], index: 1, kind: input, shape index: {}]
  %s2 = inlined_call_operand.vmem [shape: f32[1,128], index: 2, kind: input, shape index: {}]
  %s3 = inlined_call_operand.hbm [shape: f32[128,128], index: 3, kind: input, shape index: {}]
  %s4 = inlined_call_operand.hbm [shape: f32[128,128], index: 4, kind: input, shape index: {}]
  %s5 = inlined_call_operand.vmem [shape: f32[1,128], index: 5, kind: input, shape index: {}]
  %s6 = inlined_call_operand.vmem [shape: f32[8,8,128], index: 6, kind: output, shape index: {0}]
  %s7 = inlined_call_operand.vmem [shape: f32[8,128], index: 7, kind: output, shape index: {1}]
  %8 = xla_tuple %s6, %s7
  %s9 = sld [smem:[#allocation0]]
  $region50: #{rnn_net_forward.1} parent=0
    _
  %s11 = ssub.s32 1, %s9
  %s12 = scalar_select 0, %s11, %s9
  $region1: #{rnn_net_forward.1} parent=0
    #allocation2 [shape = 'u8[65536]{0}', space=vmem, size = 0x10000, scoped, tag = 'input window, operand 3, single buffered']
    #allocation3 [shape = 's32[1]{0}', space=sflag, size = 0x4, scoped, tag = 'scoped memory for rnn_net_forward.1']
    #allocation4 [shape = 'u8[65536]{0}', space=vmem, size = 0x10000, scoped, tag = 'input window, operand 4, single buffered']
    #allocation5 [shape = 's32[1]{0}', space=sflag, size = 0x4, scoped, tag = 'scoped memory for rnn_net_forward.1']
    %13 = vsyncpa [#allocation3], 0
    %14 = vsyncpa [#allocation5], 0
    // Predicated region
    $region2: #{rnn_net_forward.1} parent=1 // pred_check
      _
    $region3: #{rnn_net_forward.1} parent=1 // pred_check_branch
      %16 = sbr.rel (0) target = $region5
    $region4: #{rnn_net_forward.1} parent=1 // pred_region
      _
    $region5: #{rnn_net_forward.1} parent=1 // pred_fallthru
      _
    // Predicated region
    $region6: #{rnn_net_forward.1} parent=1 // pred_check
      _
    $region7: #{rnn_net_forward.1} parent=1 // pred_check_branch
      %18 = sbr.rel (0) target = $region9
    $region8: #{rnn_net_forward.1} parent=1 // pred_region
      _
    $region9: #{rnn_net_forward.1} parent=1 // pred_fallthru
      _
    // Predicated region
    $region10: #{rnn_net_forward.1} parent=1 // pred_check
      _
    $region11: #{rnn_net_forward.1} parent=1 // pred_check_branch
      %20 = sbr.rel (0) target = $region13
    $region12: #{rnn_net_forward.1} parent=1 // pred_region
      _
    $region13: #{rnn_net_forward.1} parent=1 // pred_fallthru
      _
    // Predicated region
    $region14: #{rnn_net_forward.1} parent=1 // pred_check
      _
    $region15: #{rnn_net_forward.1} parent=1 // pred_check_branch
      %22 = sbr.rel (0) target = $region17
    $region16: #{rnn_net_forward.1} parent=1 // pred_region
      %s24 = ssub.s32 2048, 2048
      %25 = vsyncadd [#allocation3], %s24
      %s26 = sshll.u32 [#allocation2], 4
      %s27 = int_to_ptr.vmem [resolvable:$true] %s26
      %32 = dma.hbm_to_vmem [thread:$0]  %s3, 2048, %s27, [#allocation3], 128, 128, 8
    $region17: #{rnn_net_forward.1} parent=1 // pred_fallthru
      _
    // Predicated region
    $region18: #{rnn_net_forward.1} parent=1 // pred_check
      _
    $region19: #{rnn_net_forward.1} parent=1 // pred_check_branch
      %34 = sbr.rel (0) target = $region21
    $region20: #{rnn_net_forward.1} parent=1 // pred_region
      %s36 = ssub.s32 2048, 2048
      %37 = vsyncadd [#allocation5], %s36
      %s38 = sshll.u32 [#allocation4], 4
      %s39 = int_to_ptr.vmem [resolvable:$true] %s38
      %44 = dma.hbm_to_vmem [thread:$0]  %s4, 2048, %s39, [#allocation5], 128, 128, 8
    $region21: #{rnn_net_forward.1} parent=1 // pred_fallthru
      _
    // Predicated region
    $region22: #{rnn_net_forward.1} parent=1 // pred_check
      _
    $region23: #{rnn_net_forward.1} parent=1 // pred_check_branch
      %46 = sbr.rel (0) target = $region25
    $region24: #{rnn_net_forward.1} parent=1 // pred_region
      _
    $region25: #{rnn_net_forward.1} parent=1 // pred_fallthru
      _
    // Predicated region
    $region26: #{rnn_net_forward.1} parent=1 // pred_check
      _
    $region27: #{rnn_net_forward.1} parent=1 // pred_check_branch
      %48 = sbr.rel (0) target = $region29
    $region28: #{rnn_net_forward.1} parent=1 // pred_region
      %49 = dma.done [#allocation3], 2048
    $region29: #{rnn_net_forward.1} parent=1 // pred_fallthru
      _
    // Predicated region
    $region30: #{rnn_net_forward.1} parent=1 // pred_check
      _
    $region31: #{rnn_net_forward.1} parent=1 // pred_check_branch
      %51 = sbr.rel (0) target = $region33
    $region32: #{rnn_net_forward.1} parent=1 // pred_region
      %52 = dma.done [#allocation5], 2048
    $region33: #{rnn_net_forward.1} parent=1 // pred_fallthru
      _
    %v53 = vld [vmem:[#allocation2] sm:$0xff]
    %v54 = vld [vmem:[#allocation2 + $0x8] sm:$0xff]
    %v55 = vld [vmem:[#allocation2 + $0x10] sm:$0xff]
    %v56 = vld [vmem:[#allocation2 + $0x18] sm:$0xff]
    %v57 = vld [vmem:[#allocation2 + $0x20] sm:$0xff]
    %v58 = vld [vmem:[#allocation2 + $0x28] sm:$0xff]
    %v59 = vld [vmem:[#allocation2 + $0x30] sm:$0xff]
    %v60 = vld [vmem:[#allocation2 + $0x38] sm:$0xff]
    %v61 = vld [vmem:[#allocation2 + $0x40] sm:$0xff]
    %v62 = vld [vmem:[#allocation2 + $0x48] sm:$0xff]
    %v63 = vld [vmem:[#allocation2 + $0x50] sm:$0xff]
    %v64 = vld [vmem:[#allocation2 + $0x58] sm:$0xff]
    %v65 = vld [vmem:[#allocation2 + $0x60] sm:$0xff]
    %v66 = vld [vmem:[#allocation2 + $0x68] sm:$0xff]
    %v67 = vld [vmem:[#allocation2 + $0x70] sm:$0xff]
    %v68 = vld [vmem:[#allocation2 + $0x78] sm:$0xff]
    %v69 = vld [vmem:[%s0] sm:$0xff]
    %v70 = vld [vmem:[%s0 + $0x8] sm:$0xff]
    %v71 = vld [vmem:[%s0 + $0x10] sm:$0xff]
    %v72 = vld [vmem:[%s0 + $0x18] sm:$0xff]
    %v73 = vld [vmem:[%s0 + $0x20] sm:$0xff]
    %v74 = vld [vmem:[%s0 + $0x28] sm:$0xff]
    %v75 = vld [vmem:[%s0 + $0x30] sm:$0xff]
    %v76 = vld [vmem:[%s0 + $0x38] sm:$0xff]
    %v77 = vld [vmem:[%s1] sm:$0xf]
    %v78 = vld [vmem:[%s2] sm:$0x1]
    %v80 = vlaneseq
    %v81 = vshrl.u32 %v80, 7
    %v82 = vsub.s32 0, %v81
    %v83 = vrot.slane %v78, %v82
    %vm85 = vcmask 31744
    %v87 = vsel %vm85, %v69, 0
    %v90 = vsel %vm85, %v70, 0
    %v93 = vsel %vm85, %v71, 0
    %v96 = vsel %vm85, %v72, 0
    %v99 = vsel %vm85, %v73, 0
    %v102 = vsel %vm85, %v74, 0
    %v105 = vsel %vm85, %v75, 0
    %v108 = vsel %vm85, %v76, 0
    %vm110 = vcmask 1043456
    %v112 = vsel %vm110, %v77, 0
    %114 = vmatprep.subr.mxu0 0.0
    %115 = vmatpush1.msra.mxu0 %v112
    %116 = vmatprep.subr.mxu0 0.0
    %117 = vmatpush1.msra.mxu0 0.0
    %118 = vmatprep.subr.mxu0 0.0
    %119 = vmatpush1.msra.mxu0 0.0
    %120 = vmatprep.subr.mxu0 0.0
    %121 = vmatpush1.msra.mxu0 0.0
    %122 = vmatprep.subr.mxu0 0.0
    %123 = vmatpush1.msra.mxu0 0.0
    %124 = vmatprep.subr.mxu0 0.0
    %125 = vmatpush1.msra.mxu0 0.0
    %126 = vmatprep.subr.mxu0 0.0
    %127 = vmatpush1.msra.mxu0 0.0
    %128 = vmatprep.subr.mxu0 0.0
    %129 = vmatpush1.msra.mxu0 0.0
    %130 = vmatprep.subr.mxu0 0.0
    %131 = vmatpush1.msra.mxu0 0.0
    %132 = vmatprep.subr.mxu0 0.0
    %133 = vmatpush1.msra.mxu0 0.0
    %134 = vmatprep.subr.mxu0 0.0
    %135 = vmatpush1.msra.mxu0 0.0
    %136 = vmatprep.subr.mxu0 0.0
    %137 = vmatpush1.msra.mxu0 0.0
    %138 = vmatprep.subr.mxu0 0.0
    %139 = vmatpush1.msra.mxu0 0.0
    %140 = vmatprep.subr.mxu0 0.0
    %141 = vmatpush1.msra.mxu0 0.0
    %142 = vmatprep.subr.mxu0 0.0
    %143 = vmatpush1.msra.mxu0 0.0
    %144 = vmatprep.subr.mxu0 0.0
    %145 = vmatpush1.msra.mxu0 0.0
    %146 = vmatprep.subr.mxu0 0.0
    %147 = vmatpush1.msra.mxu0 0.0
    %148 = vmatprep.subr.mxu0 0.0
    %149 = vmatpush1.msra.mxu0 0.0
    %150 = vmatprep.subr.mxu0 0.0
    %151 = vmatpush1.msra.mxu0 0.0
    %152 = vmatprep.subr.mxu0 0.0
    %153 = vmatpush1.msra.mxu0 0.0
    %154 = vmatprep.subr.mxu0 0.0
    %155 = vmatpush1.msra.mxu0 0.0
    %156 = vmatprep.subr.mxu0 0.0
    %157 = vmatpush1.msra.mxu0 0.0
    %158 = vmatprep.subr.mxu0 0.0
    %159 = vmatpush1.msra.mxu0 0.0
    %160 = vmatprep.subr.mxu0 0.0
    %161 = vmatpush1.msra.mxu0 0.0
    %162 = vmatprep.subr.mxu0 0.0
    %163 = vmatpush1.msra.mxu0 0.0
    %164 = vmatprep.subr.mxu0 0.0
    %165 = vmatpush1.msra.mxu0 0.0
    %166 = vmatprep.subr.mxu0 0.0
    %167 = vmatpush1.msra.mxu0 0.0
    %168 = vmatprep.subr.mxu0 0.0
    %169 = vmatpush1.msra.mxu0 0.0
    %170 = vmatprep.subr.mxu0 0.0
    %171 = vmatpush1.msra.mxu0 0.0
    %172 = vmatprep.subr.mxu0 0.0
    %173 = vmatpush1.msra.mxu0 0.0
    %174 = vmatprep.subr.mxu0 0.0
    %175 = vmatpush1.msra.mxu0 0.0
    %176 = vmatprep.subr.mxu0 0.0
    %177 = vmatpush1.msra.mxu0 0.0
    %178 = vmatprep.mubr.f32.mxu0 0.0
    %179 = vmatmul.mubr.f32.gmra.mrb[0].mxu0 %v87
    %v180 = vpop.f32.mrb[0].mxu0
    %v181 = vadd.f32 %v83, %v180
    %v182 = vpop.f32.mrb[0].mxu0
    %183 = vmatprep.mubr.f32.mxu0 0.0
    %184 = vmatmul.mubr.f32.gmra.mrb[0].mxu0 %v90
    %v185 = vpop.f32.mrb[0].mxu0
    %v186 = vadd.f32 %v83, %v185
    %v187 = vpop.f32.mrb[0].mxu0
    %188 = vmatprep.mubr.f32.mxu0 0.0
    %189 = vmatmul.mubr.f32.gmra.mrb[0].mxu0 %v93
    %v190 = vpop.f32.mrb[0].mxu0
    %v191 = vadd.f32 %v83, %v190
    %v192 = vpop.f32.mrb[0].mxu0
    %193 = vmatprep.mubr.f32.mxu0 0.0
    %194 = vmatmul.mubr.f32.gmra.mrb[0].mxu0 %v96
    %v195 = vpop.f32.mrb[0].mxu0
    %v196 = vadd.f32 %v83, %v195
    %v197 = vpop.f32.mrb[0].mxu0
    %198 = vmatprep.mubr.f32.mxu0 0.0
    %199 = vmatmul.mubr.f32.gmra.mrb[0].mxu0 %v99
    %v200 = vpop.f32.mrb[0].mxu0
    %v201 = vadd.f32 %v83, %v200
    %v202 = vpop.f32.mrb[0].mxu0
    %203 = vmatprep.mubr.f32.mxu0 0.0
    %204 = vmatmul.mubr.f32.gmra.mrb[0].mxu0 %v102
    %v205 = vpop.f32.mrb[0].mxu0
    %v206 = vadd.f32 %v83, %v205
    %v207 = vpop.f32.mrb[0].mxu0
    %208 = vmatprep.mubr.f32.mxu0 0.0
    %209 = vmatmul.mubr.f32.gmra.mrb[0].mxu0 %v105
    %v210 = vpop.f32.mrb[0].mxu0
    %v211 = vadd.f32 %v83, %v210
    %v212 = vpop.f32.mrb[0].mxu0
    %213 = vmatprep.mubr.f32.mxu0 0.0
    %214 = vmatmul.mubr.f32.gmra.mrb[0].mxu0 %v108
    %v215 = vpop.f32.mrb[0].mxu0
    %v216 = vadd.f32 %v83, %v215
    %v217 = vpop.f32.mrb[0].mxu0
    %218 = vdwg.mxu0
    %v219 = vmax.f32 %v181, 0.0
    %220 = vst [vmem:[%s6] sm:$0xff] %v219
    %221 = vmatprep.subr.mxu0 0.0
    %222 = vmatpush1.msra.mxu0 %v53
    %223 = vmatprep.subr.mxu0 0.0
    %224 = vmatpush1.msra.mxu0 %v54
    %225 = vmatprep.subr.mxu0 0.0
    %226 = vmatpush1.msra.mxu0 %v55
    %227 = vmatprep.subr.mxu0 0.0
    %228 = vmatpush1.msra.mxu0 %v56
    %229 = vmatprep.subr.mxu0 0.0
    %230 = vmatpush1.msra.mxu0 %v57
    %231 = vmatprep.subr.mxu0 0.0
    %232 = vmatpush1.msra.mxu0 %v58
    %233 = vmatprep.subr.mxu0 0.0
    %234 = vmatpush1.msra.mxu0 %v59
    %235 = vmatprep.subr.mxu0 0.0
    %236 = vmatpush1.msra.mxu0 %v60
    %237 = vmatprep.subr.mxu0 0.0
    %238 = vmatpush1.msra.mxu0 %v61
    %239 = vmatprep.subr.mxu0 0.0
    %240 = vmatpush1.msra.mxu0 %v62
    %241 = vmatprep.subr.mxu0 0.0
    %242 = vmatpush1.msra.mxu0 %v63
    %243 = vmatprep.subr.mxu0 0.0
    %244 = vmatpush1.msra.mxu0 %v64
    %245 = vmatprep.subr.mxu0 0.0
    %246 = vmatpush1.msra.mxu0 %v65
    %247 = vmatprep.subr.mxu0 0.0
    %248 = vmatpush1.msra.mxu0 %v66
    %249 = vmatprep.subr.mxu0 0.0
    %250 = vmatpush1.msra.mxu0 %v67
    %251 = vmatprep.subr.mxu0 0.0
    %252 = vmatpush1.msra.mxu0 %v68
    %253 = vmatprep.subr.mxu0 0.0
    %254 = vmatpush1.msra.mxu0 0.0
    %255 = vmatprep.subr.mxu0 0.0
    %256 = vmatpush1.msra.mxu0 0.0
    %257 = vmatprep.subr.mxu0 0.0
    %258 = vmatpush1.msra.mxu0 0.0
    %259 = vmatprep.subr.mxu0 0.0
    %260 = vmatpush1.msra.mxu0 0.0
    %261 = vmatprep.subr.mxu0 0.0
    %262 = vmatpush1.msra.mxu0 0.0
    %263 = vmatprep.subr.mxu0 0.0
    %264 = vmatpush1.msra.mxu0 0.0
    %265 = vmatprep.subr.mxu0 0.0
    %266 = vmatpush1.msra.mxu0 0.0
    %267 = vmatprep.subr.mxu0 0.0
    %268 = vmatpush1.msra.mxu0 0.0
    %269 = vmatprep.subr.mxu0 0.0
    %270 = vmatpush1.msra.mxu0 0.0
    %271 = vmatprep.subr.mxu0 0.0
    %272 = vmatpush1.msra.mxu0 0.0
    %273 = vmatprep.subr.mxu0 0.0
    %274 = vmatpush1.msra.mxu0 0.0
    %275 = vmatprep.subr.mxu0 0.0
    %276 = vmatpush1.msra.mxu0 0.0
    %277 = vmatprep.subr.mxu0 0.0
    %278 = vmatpush1.msra.mxu0 0.0
    %279 = vmatprep.subr.mxu0 0.0
    %280 = vmatpush1.msra.mxu0 0.0
    %281 = vmatprep.subr.mxu0 0.0
    %282 = vmatpush1.msra.mxu0 0.0
    %283 = vmatprep.subr.mxu0 0.0
    %284 = vmatpush1.msra.mxu0 0.0
    %285 = vmatprep.mubr.f32.mxu0 0.0
    %286 = vmatmul.mubr.f32.gmra.mrb[0].mxu0 %v219
    %v287 = vpop.f32.mrb[0].mxu0
    %v288 = vadd.f32 %v186, %v287
    %v289 = vpop.f32.mrb[0].mxu0
    %290 = vdwg.mxu0
    %v291 = vmul.f32 %v219, 0.8
    %v292 = vmax.f32 %v288, 0.0
    %v293 = vadd.f32 %v291, %v292
    %s294 = scalar_lea.vmem %s6, 8
    %295 = vst [vmem:[%s294] sm:$0xff] %v293
    %296 = vmatprep.subr.mxu0 0.0
    %297 = vmatpush1.msra.mxu0 %v53
    %298 = vmatprep.subr.mxu0 0.0
    %299 = vmatpush1.msra.mxu0 %v54
    %300 = vmatprep.subr.mxu0 0.0
    %301 = vmatpush1.msra.mxu0 %v55
    %302 = vmatprep.subr.mxu0 0.0
    %303 = vmatpush1.msra.mxu0 %v56
    %304 = vmatprep.subr.mxu0 0.0
    %305 = vmatpush1.msra.mxu0 %v57
    %306 = vmatprep.subr.mxu0 0.0
    %307 = vmatpush1.msra.mxu0 %v58
    %308 = vmatprep.subr.mxu0 0.0
    %309 = vmatpush1.msra.mxu0 %v59
    %310 = vmatprep.subr.mxu0 0.0
    %311 = vmatpush1.msra.mxu0 %v60
    %312 = vmatprep.subr.mxu0 0.0
    %313 = vmatpush1.msra.mxu0 %v61
    %314 = vmatprep.subr.mxu0 0.0
    %315 = vmatpush1.msra.mxu0 %v62
    %316 = vmatprep.subr.mxu0 0.0
    %317 = vmatpush1.msra.mxu0 %v63
    %318 = vmatprep.subr.mxu0 0.0
    %319 = vmatpush1.msra.mxu0 %v64
    %320 = vmatprep.subr.mxu0 0.0
    %321 = vmatpush1.msra.mxu0 %v65
    %322 = vmatprep.subr.mxu0 0.0
    %323 = vmatpush1.msra.mxu0 %v66
    %324 = vmatprep.subr.mxu0 0.0
    %325 = vmatpush1.msra.mxu0 %v67
    %326 = vmatprep.subr.mxu0 0.0
    %327 = vmatpush1.msra.mxu0 %v68
    %328 = vmatprep.subr.mxu0 0.0
    %329 = vmatpush1.msra.mxu0 0.0
    %330 = vmatprep.subr.mxu0 0.0
    %331 = vmatpush1.msra.mxu0 0.0
    %332 = vmatprep.subr.mxu0 0.0
    %333 = vmatpush1.msra.mxu0 0.0
    %334 = vmatprep.subr.mxu0 0.0
    %335 = vmatpush1.msra.mxu0 0.0
    %336 = vmatprep.subr.mxu0 0.0
    %337 = vmatpush1.msra.mxu0 0.0
    %338 = vmatprep.subr.mxu0 0.0
    %339 = vmatpush1.msra.mxu0 0.0
    %340 = vmatprep.subr.mxu0 0.0
    %341 = vmatpush1.msra.mxu0 0.0
    %342 = vmatprep.subr.mxu0 0.0
    %343 = vmatpush1.msra.mxu0 0.0
    %344 = vmatprep.subr.mxu0 0.0
    %345 = vmatpush1.msra.mxu0 0.0
    %346 = vmatprep.subr.mxu0 0.0
    %347 = vmatpush1.msra.mxu0 0.0
    %348 = vmatprep.subr.mxu0 0.0
    %349 = vmatpush1.msra.mxu0 0.0
    %350 = vmatprep.subr.mxu0 0.0
    %351 = vmatpush1.msra.mxu0 0.0
    %352 = vmatprep.subr.mxu0 0.0
    %353 = vmatpush1.msra.mxu0 0.0
    %354 = vmatprep.subr.mxu0 0.0
    %355 = vmatpush1.msra.mxu0 0.0
    %356 = vmatprep.subr.mxu0 0.0
    %357 = vmatpush1.msra.mxu0 0.0
    %358 = vmatprep.subr.mxu0 0.0
    %359 = vmatpush1.msra.mxu0 0.0
    %360 = vmatprep.mubr.f32.mxu0 0.0
    %361 = vmatmul.mubr.f32.gmra.mrb[0].mxu0 %v293
    %v362 = vpop.f32.mrb[0].mxu0
    %v363 = vadd.f32 %v191, %v362
    %v364 = vpop.f32.mrb[0].mxu0
    %365 = vdwg.mxu0
    %v366 = vmul.f32 %v293, 0.8
    %v367 = vmax.f32 %v363, 0.0
    %v368 = vadd.f32 %v366, %v367
    %s369 = scalar_lea.vmem %s6, 16
    %370 = vst [vmem:[%s369] sm:$0xff] %v368
    %371 = vmatprep.subr.mxu0 0.0
    %372 = vmatpush1.msra.mxu0 %v53
    %373 = vmatprep.subr.mxu0 0.0
    %374 = vmatpush1.msra.mxu0 %v54
    %375 = vmatprep.subr.mxu0 0.0
    %376 = vmatpush1.msra.mxu0 %v55
    %377 = vmatprep.subr.mxu0 0.0
    %378 = vmatpush1.msra.mxu0 %v56
    %379 = vmatprep.subr.mxu0 0.0
    %380 = vmatpush1.msra.mxu0 %v57
    %381 = vmatprep.subr.mxu0 0.0
    %382 = vmatpush1.msra.mxu0 %v58
    %383 = vmatprep.subr.mxu0 0.0
    %384 = vmatpush1.msra.mxu0 %v59
    %385 = vmatprep.subr.mxu0 0.0
    %386 = vmatpush1.msra.mxu0 %v60
    %387 = vmatprep.subr.mxu0 0.0
    %388 = vmatpush1.msra.mxu0 %v61
    %389 = vmatprep.subr.mxu0 0.0
    %390 = vmatpush1.msra.mxu0 %v62
    %391 = vmatprep.subr.mxu0 0.0
    %392 = vmatpush1.msra.mxu0 %v63
    %393 = vmatprep.subr.mxu0 0.0
    %394 = vmatpush1.msra.mxu0 %v64
    %395 = vmatprep.subr.mxu0 0.0
    %396 = vmatpush1.msra.mxu0 %v65
    %397 = vmatprep.subr.mxu0 0.0
    %398 = vmatpush1.msra.mxu0 %v66
    %399 = vmatprep.subr.mxu0 0.0
    %400 = vmatpush1.msra.mxu0 %v67
    %401 = vmatprep.subr.mxu0 0.0
    %402 = vmatpush1.msra.mxu0 %v68
    %403 = vmatprep.subr.mxu0 0.0
    %404 = vmatpush1.msra.mxu0 0.0
    %405 = vmatprep.subr.mxu0 0.0
    %406 = vmatpush1.msra.mxu0 0.0
    %407 = vmatprep.subr.mxu0 0.0
    %408 = vmatpush1.msra.mxu0 0.0
    %409 = vmatprep.subr.mxu0 0.0
    %410 = vmatpush1.msra.mxu0 0.0
    %411 = vmatprep.subr.mxu0 0.0
    %412 = vmatpush1.msra.mxu0 0.0
    %413 = vmatprep.subr.mxu0 0.0
    %414 = vmatpush1.msra.mxu0 0.0
    %415 = vmatprep.subr.mxu0 0.0
    %416 = vmatpush1.msra.mxu0 0.0
    %417 = vmatprep.subr.mxu0 0.0
    %418 = vmatpush1.msra.mxu0 0.0
    %419 = vmatprep.subr.mxu0 0.0
    %420 = vmatpush1.msra.mxu0 0.0
    %421 = vmatprep.subr.mxu0 0.0
    %422 = vmatpush1.msra.mxu0 0.0
    %423 = vmatprep.subr.mxu0 0.0
    %424 = vmatpush1.msra.mxu0 0.0
    %425 = vmatprep.subr.mxu0 0.0
    %426 = vmatpush1.msra.mxu0 0.0
    %427 = vmatprep.subr.mxu0 0.0
    %428 = vmatpush1.msra.mxu0 0.0
    %429 = vmatprep.subr.mxu0 0.0
    %430 = vmatpush1.msra.mxu0 0.0
    %431 = vmatprep.subr.mxu0 0.0
    %432 = vmatpush1.msra.mxu0 0.0
    %433 = vmatprep.subr.mxu0 0.0
    %434 = vmatpush1.msra.mxu0 0.0
    %435 = vmatprep.mubr.f32.mxu0 0.0
    %436 = vmatmul.mubr.f32.gmra.mrb[0].mxu0 %v368
    %v437 = vpop.f32.mrb[0].mxu0
    %v438 = vadd.f32 %v196, %v437
    %v439 = vpop.f32.mrb[0].mxu0
    %440 = vdwg.mxu0
    %v441 = vmul.f32 %v368, 0.8
    %v442 = vmax.f32 %v438, 0.0
    %v443 = vadd.f32 %v441, %v442
    %s444 = scalar_lea.vmem %s6, 24
    %445 = vst [vmem:[%s444] sm:$0xff] %v443
    %446 = vmatprep.subr.mxu0 0.0
    %447 = vmatpush1.msra.mxu0 %v53
    %448 = vmatprep.subr.mxu0 0.0
    %449 = vmatpush1.msra.mxu0 %v54
    %450 = vmatprep.subr.mxu0 0.0
    %451 = vmatpush1.msra.mxu0 %v55
    %452 = vmatprep.subr.mxu0 0.0
    %453 = vmatpush1.msra.mxu0 %v56
    %454 = vmatprep.subr.mxu0 0.0
    %455 = vmatpush1.msra.mxu0 %v57
    %456 = vmatprep.subr.mxu0 0.0
    %457 = vmatpush1.msra.mxu0 %v58
    %458 = vmatprep.subr.mxu0 0.0
    %459 = vmatpush1.msra.mxu0 %v59
    %460 = vmatprep.subr.mxu0 0.0
    %461 = vmatpush1.msra.mxu0 %v60
    %462 = vmatprep.subr.mxu0 0.0
    %463 = vmatpush1.msra.mxu0 %v61
    %464 = vmatprep.subr.mxu0 0.0
    %465 = vmatpush1.msra.mxu0 %v62
    %466 = vmatprep.subr.mxu0 0.0
    %467 = vmatpush1.msra.mxu0 %v63
    %468 = vmatprep.subr.mxu0 0.0
    %469 = vmatpush1.msra.mxu0 %v64
    %470 = vmatprep.subr.mxu0 0.0
    %471 = vmatpush1.msra.mxu0 %v65
    %472 = vmatprep.subr.mxu0 0.0
    %473 = vmatpush1.msra.mxu0 %v66
    %474 = vmatprep.subr.mxu0 0.0
    %475 = vmatpush1.msra.mxu0 %v67
    %476 = vmatprep.subr.mxu0 0.0
    %477 = vmatpush1.msra.mxu0 %v68
    %478 = vmatprep.subr.mxu0 0.0
    %479 = vmatpush1.msra.mxu0 0.0
    %480 = vmatprep.subr.mxu0 0.0
    %481 = vmatpush1.msra.mxu0 0.0
    %482 = vmatprep.subr.mxu0 0.0
    %483 = vmatpush1.msra.mxu0 0.0
    %484 = vmatprep.subr.mxu0 0.0
    %485 = vmatpush1.msra.mxu0 0.0
    %486 = vmatprep.subr.mxu0 0.0
    %487 = vmatpush1.msra.mxu0 0.0
    %488 = vmatprep.subr.mxu0 0.0
    %489 = vmatpush1.msra.mxu0 0.0
    %490 = vmatprep.subr.mxu0 0.0
    %491 = vmatpush1.msra.mxu0 0.0
    %492 = vmatprep.subr.mxu0 0.0
    %493 = vmatpush1.msra.mxu0 0.0
    %494 = vmatprep.subr.mxu0 0.0
    %495 = vmatpush1.msra.mxu0 0.0
    %496 = vmatprep.subr.mxu0 0.0
    %497 = vmatpush1.msra.mxu0 0.0
    %498 = vmatprep.subr.mxu0 0.0
    %499 = vmatpush1.msra.mxu0 0.0
    %500 = vmatprep.subr.mxu0 0.0
    %501 = vmatpush1.msra.mxu0 0.0
    %502 = vmatprep.subr.mxu0 0.0
    %503 = vmatpush1.msra.mxu0 0.0
    %504 = vmatprep.subr.mxu0 0.0
    %505 = vmatpush1.msra.mxu0 0.0
    %506 = vmatprep.subr.mxu0 0.0
    %507 = vmatpush1.msra.mxu0 0.0
    %508 = vmatprep.subr.mxu0 0.0
    %509 = vmatpush1.msra.mxu0 0.0
    %510 = vmatprep.mubr.f32.mxu0 0.0
    %511 = vmatmul.mubr.f32.gmra.mrb[0].mxu0 %v443
    %v512 = vpop.f32.mrb[0].mxu0
    %v513 = vadd.f32 %v201, %v512
    %v514 = vpop.f32.mrb[0].mxu0
    %515 = vdwg.mxu0
    %v516 = vmul.f32 %v443, 0.8
    %v517 = vmax.f32 %v513, 0.0
    %v518 = vadd.f32 %v516, %v517
    %s519 = scalar_lea.vmem %s6, 32
    %520 = vst [vmem:[%s519] sm:$0xff] %v518
    %521 = vmatprep.subr.mxu0 0.0
    %522 = vmatpush1.msra.mxu0 %v53
    %523 = vmatprep.subr.mxu0 0.0
    %524 = vmatpush1.msra.mxu0 %v54
    %525 = vmatprep.subr.mxu0 0.0
    %526 = vmatpush1.msra.mxu0 %v55
    %527 = vmatprep.subr.mxu0 0.0
    %528 = vmatpush1.msra.mxu0 %v56
    %529 = vmatprep.subr.mxu0 0.0
    %530 = vmatpush1.msra.mxu0 %v57
    %531 = vmatprep.subr.mxu0 0.0
    %532 = vmatpush1.msra.mxu0 %v58
    %533 = vmatprep.subr.mxu0 0.0
    %534 = vmatpush1.msra.mxu0 %v59
    %535 = vmatprep.subr.mxu0 0.0
    %536 = vmatpush1.msra.mxu0 %v60
    %537 = vmatprep.subr.mxu0 0.0
    %538 = vmatpush1.msra.mxu0 %v61
    %539 = vmatprep.subr.mxu0 0.0
    %540 = vmatpush1.msra.mxu0 %v62
    %541 = vmatprep.subr.mxu0 0.0
    %542 = vmatpush1.msra.mxu0 %v63
    %543 = vmatprep.subr.mxu0 0.0
    %544 = vmatpush1.msra.mxu0 %v64
    %545 = vmatprep.subr.mxu0 0.0
    %546 = vmatpush1.msra.mxu0 %v65
    %547 = vmatprep.subr.mxu0 0.0
    %548 = vmatpush1.msra.mxu0 %v66
    %549 = vmatprep.subr.mxu0 0.0
    %550 = vmatpush1.msra.mxu0 %v67
    %551 = vmatprep.subr.mxu0 0.0
    %552 = vmatpush1.msra.mxu0 %v68
    %553 = vmatprep.subr.mxu0 0.0
    %554 = vmatpush1.msra.mxu0 0.0
    %555 = vmatprep.subr.mxu0 0.0
    %556 = vmatpush1.msra.mxu0 0.0
    %557 = vmatprep.subr.mxu0 0.0
    %558 = vmatpush1.msra.mxu0 0.0
    %559 = vmatprep.subr.mxu0 0.0
    %560 = vmatpush1.msra.mxu0 0.0
    %561 = vmatprep.subr.mxu0 0.0
    %562 = vmatpush1.msra.mxu0 0.0
    %563 = vmatprep.subr.mxu0 0.0
    %564 = vmatpush1.msra.mxu0 0.0
    %565 = vmatprep.subr.mxu0 0.0
    %566 = vmatpush1.msra.mxu0 0.0
    %567 = vmatprep.subr.mxu0 0.0
    %568 = vmatpush1.msra.mxu0 0.0
    %569 = vmatprep.subr.mxu0 0.0
    %570 = vmatpush1.msra.mxu0 0.0
    %571 = vmatprep.subr.mxu0 0.0
    %572 = vmatpush1.msra.mxu0 0.0
    %573 = vmatprep.subr.mxu0 0.0
    %574 = vmatpush1.msra.mxu0 0.0
    %575 = vmatprep.subr.mxu0 0.0
    %576 = vmatpush1.msra.mxu0 0.0
    %577 = vmatprep.subr.mxu0 0.0
    %578 = vmatpush1.msra.mxu0 0.0
    %579 = vmatprep.subr.mxu0 0.0
    %580 = vmatpush1.msra.mxu0 0.0
    %581 = vmatprep.subr.mxu0 0.0
    %582 = vmatpush1.msra.mxu0 0.0
    %583 = vmatprep.subr.mxu0 0.0
    %584 = vmatpush1.msra.mxu0 0.0
    %585 = vmatprep.mubr.f32.mxu0 0.0
    %586 = vmatmul.mubr.f32.gmra.mrb[0].mxu0 %v518
    %v587 = vpop.f32.mrb[0].mxu0
    %v588 = vadd.f32 %v206, %v587
    %v589 = vpop.f32.mrb[0].mxu0
    %590 = vdwg.mxu0
    %v591 = vmul.f32 %v518, 0.8
    %v592 = vmax.f32 %v588, 0.0
    %v593 = vadd.f32 %v591, %v592
    %s594 = scalar_lea.vmem %s6, 40
    %595 = vst [vmem:[%s594] sm:$0xff] %v593
    %596 = vmatprep.subr.mxu0 0.0
    %597 = vmatpush1.msra.mxu0 %v53
    %598 = vmatprep.subr.mxu0 0.0
    %599 = vmatpush1.msra.mxu0 %v54
    %600 = vmatprep.subr.mxu0 0.0
    %601 = vmatpush1.msra.mxu0 %v55
    %602 = vmatprep.subr.mxu0 0.0
    %603 = vmatpush1.msra.mxu0 %v56
    %604 = vmatprep.subr.mxu0 0.0
    %605 = vmatpush1.msra.mxu0 %v57
    %606 = vmatprep.subr.mxu0 0.0
    %607 = vmatpush1.msra.mxu0 %v58
    %608 = vmatprep.subr.mxu0 0.0
    %609 = vmatpush1.msra.mxu0 %v59
    %610 = vmatprep.subr.mxu0 0.0
    %611 = vmatpush1.msra.mxu0 %v60
    %612 = vmatprep.subr.mxu0 0.0
    %613 = vmatpush1.msra.mxu0 %v61
    %614 = vmatprep.subr.mxu0 0.0
    %615 = vmatpush1.msra.mxu0 %v62
    %616 = vmatprep.subr.mxu0 0.0
    %617 = vmatpush1.msra.mxu0 %v63
    %618 = vmatprep.subr.mxu0 0.0
    %619 = vmatpush1.msra.mxu0 %v64
    %620 = vmatprep.subr.mxu0 0.0
    %621 = vmatpush1.msra.mxu0 %v65
    %622 = vmatprep.subr.mxu0 0.0
    %623 = vmatpush1.msra.mxu0 %v66
    %624 = vmatprep.subr.mxu0 0.0
    %625 = vmatpush1.msra.mxu0 %v67
    %626 = vmatprep.subr.mxu0 0.0
    %627 = vmatpush1.msra.mxu0 %v68
    %628 = vmatprep.subr.mxu0 0.0
    %629 = vmatpush1.msra.mxu0 0.0
    %630 = vmatprep.subr.mxu0 0.0
    %631 = vmatpush1.msra.mxu0 0.0
    %632 = vmatprep.subr.mxu0 0.0
    %633 = vmatpush1.msra.mxu0 0.0
    %634 = vmatprep.subr.mxu0 0.0
    %635 = vmatpush1.msra.mxu0 0.0
    %636 = vmatprep.subr.mxu0 0.0
    %637 = vmatpush1.msra.mxu0 0.0
    %638 = vmatprep.subr.mxu0 0.0
    %639 = vmatpush1.msra.mxu0 0.0
    %640 = vmatprep.subr.mxu0 0.0
    %641 = vmatpush1.msra.mxu0 0.0
    %642 = vmatprep.subr.mxu0 0.0
    %643 = vmatpush1.msra.mxu0 0.0
    %644 = vmatprep.subr.mxu0 0.0
    %645 = vmatpush1.msra.mxu0 0.0
    %646 = vmatprep.subr.mxu0 0.0
    %647 = vmatpush1.msra.mxu0 0.0
    %648 = vmatprep.subr.mxu0 0.0
    %649 = vmatpush1.msra.mxu0 0.0
    %650 = vmatprep.subr.mxu0 0.0
    %651 = vmatpush1.msra.mxu0 0.0
    %652 = vmatprep.subr.mxu0 0.0
    %653 = vmatpush1.msra.mxu0 0.0
    %654 = vmatprep.subr.mxu0 0.0
    %655 = vmatpush1.msra.mxu0 0.0
    %656 = vmatprep.subr.mxu0 0.0
    %657 = vmatpush1.msra.mxu0 0.0
    %658 = vmatprep.subr.mxu0 0.0
    %659 = vmatpush1.msra.mxu0 0.0
    %660 = vmatprep.mubr.f32.mxu0 0.0
    %661 = vmatmul.mubr.f32.gmra.mrb[0].mxu0 %v593
    %v662 = vpop.f32.mrb[0].mxu0
    %v663 = vadd.f32 %v211, %v662
    %v664 = vpop.f32.mrb[0].mxu0
    %665 = vdwg.mxu0
    %v666 = vmul.f32 %v593, 0.8
    %v667 = vmax.f32 %v663, 0.0
    %v668 = vadd.f32 %v666, %v667
    %s669 = scalar_lea.vmem %s6, 48
    %670 = vst [vmem:[%s669] sm:$0xff] %v668
    %671 = vmatprep.subr.mxu0 0.0
    %672 = vmatpush1.msra.mxu0 %v53
    %673 = vmatprep.subr.mxu0 0.0
    %674 = vmatpush1.msra.mxu0 %v54
    %675 = vmatprep.subr.mxu0 0.0
    %676 = vmatpush1.msra.mxu0 %v55
    %677 = vmatprep.subr.mxu0 0.0
    %678 = vmatpush1.msra.mxu0 %v56
    %679 = vmatprep.subr.mxu0 0.0
    %680 = vmatpush1.msra.mxu0 %v57
    %681 = vmatprep.subr.mxu0 0.0
    %682 = vmatpush1.msra.mxu0 %v58
    %683 = vmatprep.subr.mxu0 0.0
    %684 = vmatpush1.msra.mxu0 %v59
    %685 = vmatprep.subr.mxu0 0.0
    %686 = vmatpush1.msra.mxu0 %v60
    %687 = vmatprep.subr.mxu0 0.0
    %688 = vmatpush1.msra.mxu0 %v61
    %689 = vmatprep.subr.mxu0 0.0
    %690 = vmatpush1.msra.mxu0 %v62
    %691 = vmatprep.subr.mxu0 0.0
    %692 = vmatpush1.msra.mxu0 %v63
    %693 = vmatprep.subr.mxu0 0.0
    %694 = vmatpush1.msra.mxu0 %v64
    %695 = vmatprep.subr.mxu0 0.0
    %696 = vmatpush1.msra.mxu0 %v65
    %697 = vmatprep.subr.mxu0 0.0
    %698 = vmatpush1.msra.mxu0 %v66
    %699 = vmatprep.subr.mxu0 0.0
    %700 = vmatpush1.msra.mxu0 %v67
    %701 = vmatprep.subr.mxu0 0.0
    %702 = vmatpush1.msra.mxu0 %v68
    %703 = vmatprep.subr.mxu0 0.0
    %704 = vmatpush1.msra.mxu0 0.0
    %705 = vmatprep.subr.mxu0 0.0
    %706 = vmatpush1.msra.mxu0 0.0
    %707 = vmatprep.subr.mxu0 0.0
    %708 = vmatpush1.msra.mxu0 0.0
    %709 = vmatprep.subr.mxu0 0.0
    %710 = vmatpush1.msra.mxu0 0.0
    %711 = vmatprep.subr.mxu0 0.0
    %712 = vmatpush1.msra.mxu0 0.0
    %713 = vmatprep.subr.mxu0 0.0
    %714 = vmatpush1.msra.mxu0 0.0
    %715 = vmatprep.subr.mxu0 0.0
    %716 = vmatpush1.msra.mxu0 0.0
    %717 = vmatprep.subr.mxu0 0.0
    %718 = vmatpush1.msra.mxu0 0.0
    %719 = vmatprep.subr.mxu0 0.0
    %720 = vmatpush1.msra.mxu0 0.0
    %721 = vmatprep.subr.mxu0 0.0
    %722 = vmatpush1.msra.mxu0 0.0
    %723 = vmatprep.subr.mxu0 0.0
    %724 = vmatpush1.msra.mxu0 0.0
    %725 = vmatprep.subr.mxu0 0.0
    %726 = vmatpush1.msra.mxu0 0.0
    %727 = vmatprep.subr.mxu0 0.0
    %728 = vmatpush1.msra.mxu0 0.0
    %729 = vmatprep.subr.mxu0 0.0
    %730 = vmatpush1.msra.mxu0 0.0
    %731 = vmatprep.subr.mxu0 0.0
    %732 = vmatpush1.msra.mxu0 0.0
    %733 = vmatprep.subr.mxu0 0.0
    %734 = vmatpush1.msra.mxu0 0.0
    %735 = vmatprep.mubr.f32.mxu0 0.0
    %736 = vmatmul.mubr.f32.gmra.mrb[0].mxu0 %v668
    %v737 = vpop.f32.mrb[0].mxu0
    %v738 = vadd.f32 %v216, %v737
    %v739 = vpop.f32.mrb[0].mxu0
    %740 = vdwg.mxu0
    %v741 = vmul.f32 %v668, 0.8
    %v742 = vmax.f32 %v738, 0.0
    %v743 = vadd.f32 %v741, %v742
    %s744 = scalar_lea.vmem %s6, 56
    %745 = vst [vmem:[%s744] sm:$0xff] %v743
    %v746 = vld [vmem:[#allocation4] sm:$0xff]
    %v747 = vld [vmem:[#allocation4 + $0x8] sm:$0xff]
    %v748 = vld [vmem:[#allocation4 + $0x10] sm:$0xff]
    %v749 = vld [vmem:[#allocation4 + $0x18] sm:$0xff]
    %v750 = vld [vmem:[#allocation4 + $0x20] sm:$0xff]
    %v751 = vld [vmem:[#allocation4 + $0x28] sm:$0xff]
    %v752 = vld [vmem:[#allocation4 + $0x30] sm:$0xff]
    %v753 = vld [vmem:[#allocation4 + $0x38] sm:$0xff]
    %v754 = vld [vmem:[#allocation4 + $0x40] sm:$0xff]
    %v755 = vld [vmem:[#allocation4 + $0x48] sm:$0xff]
    %v756 = vld [vmem:[#allocation4 + $0x50] sm:$0xff]
    %v757 = vld [vmem:[#allocation4 + $0x58] sm:$0xff]
    %v758 = vld [vmem:[#allocation4 + $0x60] sm:$0xff]
    %v759 = vld [vmem:[#allocation4 + $0x68] sm:$0xff]
    %v760 = vld [vmem:[#allocation4 + $0x70] sm:$0xff]
    %v761 = vld [vmem:[#allocation4 + $0x78] sm:$0xff]
    %v762 = vld [vmem:[%s5] sm:$0x1]
    %v764 = vlaneseq
    %v765 = vshrl.u32 %v764, 7
    %v766 = vsub.s32 0, %v765
    %v767 = vrot.slane %v762, %v766
    %769 = vmatprep.subr.mxu0 0.0
    %770 = vmatpush1.msra.mxu0 %v746
    %771 = vmatprep.subr.mxu0 0.0
    %772 = vmatpush1.msra.mxu0 %v747
    %773 = vmatprep.subr.mxu0 0.0
    %774 = vmatpush1.msra.mxu0 %v748
    %775 = vmatprep.subr.mxu0 0.0
    %776 = vmatpush1.msra.mxu0 %v749
    %777 = vmatprep.subr.mxu0 0.0
    %778 = vmatpush1.msra.mxu0 %v750
    %779 = vmatprep.subr.mxu0 0.0
    %780 = vmatpush1.msra.mxu0 %v751
    %781 = vmatprep.subr.mxu0 0.0
    %782 = vmatpush1.msra.mxu0 %v752
    %783 = vmatprep.subr.mxu0 0.0
    %784 = vmatpush1.msra.mxu0 %v753
    %785 = vmatprep.subr.mxu0 0.0
    %786 = vmatpush1.msra.mxu0 %v754
    %787 = vmatprep.subr.mxu0 0.0
    %788 = vmatpush1.msra.mxu0 %v755
    %789 = vmatprep.subr.mxu0 0.0
    %790 = vmatpush1.msra.mxu0 %v756
    %791 = vmatprep.subr.mxu0 0.0
    %792 = vmatpush1.msra.mxu0 %v757
    %793 = vmatprep.subr.mxu0 0.0
    %794 = vmatpush1.msra.mxu0 %v758
    %795 = vmatprep.subr.mxu0 0.0
    %796 = vmatpush1.msra.mxu0 %v759
    %797 = vmatprep.subr.mxu0 0.0
    %798 = vmatpush1.msra.mxu0 %v760
    %799 = vmatprep.subr.mxu0 0.0
    %800 = vmatpush1.msra.mxu0 %v761
    %801 = vmatprep.subr.mxu0 0.0
    %802 = vmatpush1.msra.mxu0 0.0
    %803 = vmatprep.subr.mxu0 0.0
    %804 = vmatpush1.msra.mxu0 0.0
    %805 = vmatprep.subr.mxu0 0.0
    %806 = vmatpush1.msra.mxu0 0.0
    %807 = vmatprep.subr.mxu0 0.0
    %808 = vmatpush1.msra.mxu0 0.0
    %809 = vmatprep.subr.mxu0 0.0
    %810 = vmatpush1.msra.mxu0 0.0
    %811 = vmatprep.subr.mxu0 0.0
    %812 = vmatpush1.msra.mxu0 0.0
    %813 = vmatprep.subr.mxu0 0.0
    %814 = vmatpush1.msra.mxu0 0.0
    %815 = vmatprep.subr.mxu0 0.0
    %816 = vmatpush1.msra.mxu0 0.0
    %817 = vmatprep.subr.mxu0 0.0
    %818 = vmatpush1.msra.mxu0 0.0
    %819 = vmatprep.subr.mxu0 0.0
    %820 = vmatpush1.msra.mxu0 0.0
    %821 = vmatprep.subr.mxu0 0.0
    %822 = vmatpush1.msra.mxu0 0.0
    %823 = vmatprep.subr.mxu0 0.0
    %824 = vmatpush1.msra.mxu0 0.0
    %825 = vmatprep.subr.mxu0 0.0
    %826 = vmatpush1.msra.mxu0 0.0
    %827 = vmatprep.subr.mxu0 0.0
    %828 = vmatpush1.msra.mxu0 0.0
    %829 = vmatprep.subr.mxu0 0.0
    %830 = vmatpush1.msra.mxu0 0.0
    %831 = vmatprep.subr.mxu0 0.0
    %832 = vmatpush1.msra.mxu0 0.0
    %833 = vmatprep.mubr.f32.mxu0 0.0
    %834 = vmatmul.mubr.f32.gmra.mrb[0].mxu0 %v743
    %v835 = vpop.f32.mrb[0].mxu0
    %v836 = vadd.f32 %v767, %v835
    %v837 = vpop.f32.mrb[0].mxu0
    %838 = vdwg.mxu0
    %839 = vmax.xlane.f32.xlu0 %v836
    %v840 = vpop.xlane.xlu0 %839
    %v841 = vsub.f32 %v836, %v840
    %v842 = vmul.f32 %v841, 1.442695
    %v843 = vpow.pop %v842
    %844 = vadd.xlane.f32.xlu0 %v843
    %v845 = vpop.xlane.xlu0 %844
    %v846 = vrcp.pop %v845
    %v847 = vmul.f32 %v843, %v846
    %848 = vst [vmem:[%s7] sm:$0xff] %v847
    // Predicated region
    $region34: #{rnn_net_forward.1} parent=1 // pred_check
      _
    $region35: #{rnn_net_forward.1} parent=1 // pred_check_branch
      %850 = sbr.rel (0) target = $region37
    $region36: #{rnn_net_forward.1} parent=1 // pred_region
      _
    $region37: #{rnn_net_forward.1} parent=1 // pred_fallthru
      _
    // Predicated region
    $region38: #{rnn_net_forward.1} parent=1 // pred_check
      _
    $region39: #{rnn_net_forward.1} parent=1 // pred_check_branch
      %852 = sbr.rel (0) target = $region41
    $region40: #{rnn_net_forward.1} parent=1 // pred_region
      _
    $region41: #{rnn_net_forward.1} parent=1 // pred_fallthru
      _
    // Predicated region
    $region42: #{rnn_net_forward.1} parent=1 // pred_check
      _
    $region43: #{rnn_net_forward.1} parent=1 // pred_check_branch
      %854 = sbr.rel (0) target = $region45
    $region44: #{rnn_net_forward.1} parent=1 // pred_region
      _
    $region45: #{rnn_net_forward.1} parent=1 // pred_fallthru
      _
    // Predicated region
    $region46: #{rnn_net_forward.1} parent=1 // pred_check
      _
    $region47: #{rnn_net_forward.1} parent=1 // pred_check_branch
      %856 = sbr.rel (0) target = $region49
    $region48: #{rnn_net_forward.1} parent=1 // pred_region
      _
    $region49: #{rnn_net_forward.1} parent=1 // pred_fallthru
      _
    %857 = vsyncpa [#allocation3], 1
    %858 = vsyncpa [#allocation5], 1

</llo_original>
